<compile_context>
chip_gen: v5e
topology: v5e:2x2
jax: 0.10.0
libtpu: 0.0.40
codegen_flags: <defaults>
</compile_context>

<pallas_src>
import jax
import jax.numpy as jnp
from jax.experimental import pallas as pl
from jax.experimental.pallas import tpu as pltpu


# ----------------------------------------------------------------------------
# Fused kernel, BB batch elements per grid step.  Per element:
#   h     = relu(W1ᵀ·x + b1)            (VPU outer-product FMAs, C-deep)
#   heat  = W2ᵀ·h + b2                  [K, S]   (MXU, S lane-dense)
#   p     = softmax(heat, axis=-1)      [K, S]   -> probs_ref (bf16)
#   kp    = [Σ p·cx, Σ p·cy]            [K, 2]
#   conc  = Σ_k (Σ_s p·(cx²+cy²) − kp_x² − kp_y²)    scalar partial
#   reg   = Σ_k (kp_x² + kp_y²)                      scalar partial
#   kp + (conc, reg) packed into small_ref[bb] : [K+1, 2]
# ----------------------------------------------------------------------------
def _fused_forward_kernel(x_ref, w1t_ref, b1_ref, w2t_ref, b2_ref, coords_ref,
                          probs_ref, small_ref):
    BB, C, S = x_ref.shape
    Hd = w1t_ref.shape[0]
    K = w2t_ref.shape[0]

    w1t = w1t_ref[...]                  # [Hd, C]
    b1 = b1_ref[...]                    # [Hd, 1]
    w2t = w2t_ref[...]                  # [K, Hd]
    b2 = b2_ref[...]                    # [K, 1]
    cx = coords_ref[0:1, :]             # [1, S]
    cy = coords_ref[1:2, :]             # [1, S]
    c2 = coords_ref[2:3, :]             # [1, S]  (= cx² + cy², precomputed)
    # Hoisted out of the bb loop (broadcasts are not CSE'd by JAX).
    w1_cols = [w1t[:, c:c + 1] for c in range(C)]    # C × [Hd, 1]

    for bb in range(BB):                # static unroll -> independent chains
        x = x_ref[bb]                   # [C, S]

        # ---- layer 1: C-deep contraction as VPU FMAs (MXU would be <4%
        #      utilized at C=4 and pay fill/drain on the critical path) ----
        h = w1_cols[0] * x[0:1, :] + b1              # [Hd, S]
        for c in range(1, C):
            h = h + w1_cols[c] * x[c:c + 1, :]
        h = jnp.maximum(h, 0.0)

        # ---- layer 2 on the MXU: [K, Hd] x [Hd, S] ----
        heat = jnp.dot(w2t, h, preferred_element_type=jnp.float32) + b2   # [K, S]

        # ---- spatial softmax over S (exact reciprocal: heatmaps sum to 1) ----
        m = jnp.max(heat, axis=-1, keepdims=True)                # [K, 1]
        e = jnp.exp(heat - m)                                    # [K, S]
        inv = 1.0 / jnp.sum(e, axis=-1, keepdims=True)           # [K, 1]
        probs_ref[bb] = (e * inv).astype(probs_ref.dtype)        # [K, S] bf16 store

        # ---- soft-argmax + simplified metrics on un-normalized e ----
        kp_x = inv * jnp.sum(e * cx, axis=-1, keepdims=True)     # [K, 1]
        kp_y = inv * jnp.sum(e * cy, axis=-1, keepdims=True)     # [K, 1]
        kp_sq = kp_x * kp_x + kp_y * kp_y                        # [K, 1]
        conc_k = inv * jnp.sum(e * c2, axis=-1, keepdims=True) - kp_sq
        conc = jnp.sum(conc_k, axis=0, keepdims=True)            # [1, 1]
        reg = jnp.sum(kp_sq, axis=0, keepdims=True)              # [1, 1]

        # ---- single small per-element output stream ----
        col_k = jax.lax.broadcasted_iota(jnp.int32, (K, 2), 1)
        small_ref[bb, 0:K, :] = jnp.where(col_k == 0, kp_x, kp_y)     # keypoints
        col_m = jax.lax.broadcasted_iota(jnp.int32, (1, 2), 1)
        small_ref[bb, K:K + 1, :] = jnp.where(col_m == 0, conc, reg)  # metric partials


def fused_forward(x_cs, w1_t, b1_col, w2_t, b2_col, coords3, *,
                  batch_block=8, probs_dtype=jnp.bfloat16):
    """x_cs: [B, C, S]; returns probs [B,K,S] (bf16), small [B,K+1,2] (f32)."""
    B, C, S = x_cs.shape
    Hd = w1_t.shape[0]
    K = w2_t.shape[0]
    assert S % 128 == 0, "spatial axis must be lane-dense (multiple of 128)"

    # Batch-block sizing: amortize per-grid-step overhead; per-step double-
    # buffered VMEM footprint ≈ 2·BB·S·(4·C + 2·K) bytes — well under 1 MiB at
    # BB=8, comfortably inside v7x's 64 MiB (32 MiB scoped) VMEM.
    BB = min(B, batch_block)
    n_steps = -(-B // BB)
    B_pad = n_steps * BB
    if B_pad != B:
        # Padded elements produce garbage probs/kp/metrics that are sliced off
        # below before any reduction, so no masking is needed in the kernel.
        x_cs = jnp.pad(x_cs, ((0, B_pad - B), (0, 0), (0, 0)))

    probs, small = pl.pallas_call(
        _fused_forward_kernel,
        out_shape=(
            jax.ShapeDtypeStruct((B_pad, K, S), probs_dtype),
            jax.ShapeDtypeStruct((B_pad, K + 1, 2), jnp.float32),
        ),
        grid=(n_steps,),
        in_specs=[
            pl.BlockSpec((BB, C, S), lambda i: (i, 0, 0)),   # x (lane-dense S)
            pl.BlockSpec((Hd, C), lambda i: (0, 0)),         # W1ᵀ
            pl.BlockSpec((Hd, 1), lambda i: (0, 0)),         # b1 (column)
            pl.BlockSpec((K, Hd), lambda i: (0, 0)),         # W2ᵀ
            pl.BlockSpec((K, 1), lambda i: (0, 0)),          # b2 (column)
            pl.BlockSpec((3, S), lambda i: (0, 0)),          # coords (cx, cy, cx²+cy²)
        ],
        out_specs=(
            pl.BlockSpec((BB, K, S), lambda i: (i, 0, 0)),        # probs (lane-dense)
            pl.BlockSpec((BB, K + 1, 2), lambda i: (i, 0, 0)),    # kp + metric partials
        ),
        compiler_params=pltpu.CompilerParams(
            dimension_semantics=("parallel",),     # batch blocks across TCs (v7x)
            vmem_limit_bytes=32 * 1024 * 1024),
    )(x_cs, w1_t, b1_col, w2_t, b2_col, coords3)
    return probs[:B], small[:B]


# ----------------------------------------------------------------------------
# Synthetic MyIMM-style base model (stands in for get_basemodel)
# ----------------------------------------------------------------------------
class PallasIMMModel:
    def __init__(self, key, in_channels=4, hidden=32, num_keypoints=8, H=16, W=16):
        k1, k2, k3, k4 = jax.random.split(key, 4)
        self.C, self.Hd, self.K, self.H, self.W = in_channels, hidden, num_keypoints, H, W
        # canonical (reference) parameterization
        self.w1 = 0.1 * jax.random.normal(k1, (in_channels, hidden), jnp.float32)
        self.b1 = 0.1 * jax.random.normal(k2, (1, hidden), jnp.float32)
        self.w2 = 0.1 * jax.random.normal(k3, (hidden, num_keypoints), jnp.float32)
        self.b2 = 0.1 * jax.random.normal(k4, (1, num_keypoints), jnp.float32)
        # transposed copies for the lane-dense [C,S] -> [K,S] kernel layout
        self.w1_t = jnp.transpose(self.w1)      # [Hd, C]
        self.b1_col = jnp.transpose(self.b1)    # [Hd, 1]
        self.w2_t = jnp.transpose(self.w2)      # [K, Hd]
        self.b2_col = jnp.transpose(self.b2)    # [K, 1]
        # normalized pixel coordinate grid
        ys, xs = jnp.meshgrid(jnp.linspace(-1.0, 1.0, H),
                              jnp.linspace(-1.0, 1.0, W), indexing="ij")
        cx = xs.reshape(-1).astype(jnp.float32)
        cy = ys.reshape(-1).astype(jnp.float32)
        self.coords = jnp.stack([cx, cy], axis=1)                    # [S, 2] (reference only)
        # kernel operand: lane-dense [3, S] = (cx, cy, cx^2 + cy^2)
        self.coords3 = jnp.stack([cx, cy, cx * cx + cy * cy], axis=0)

    def __call__(self, ddata, mode="full_pipeline"):
        x = ddata["image"]                       # NCHW [B, C, H, W]
        B, C, H, W = x.shape
        S = H * W
        x_cs = x.reshape(B, C, S)                # NCHW -> [B, C, S]: pure reshape, no transpose
        probs, small = fused_forward(
            x_cs, self.w1_t, self.b1_col, self.w2_t, self.b2_col, self.coords3)
        kp = small[:, :self.K, :]                               # [B, K, 2] f32
        # Combine per-batch metric partials ONCE here; metrics below just normalize.
        conc_sum = jnp.sum(small[:, self.K, 0])
        reg_sum = jnp.sum(small[:, self.K, 1])
        return {
            "heatmaps": probs.reshape(B, self.K, H, W),         # bf16 HBM stream
            "keypoints": kp,
            "_conc_sum": conc_sum,
            "_reg_sum": reg_sum,
        }


# ----------------------------------------------------------------------------
# ModelWarperV2 equivalent
# ----------------------------------------------------------------------------
class ModelWarperV2Pallas:
    def __init__(self, key):
        self.model = PallasIMMModel(key)
        # (name, metric_fn, weight, alias) — mirrors get_metrics(metriclist_train)
        self.metrics_train = [
            ("ConcentrationLoss", self._concentration_metric, 1.0, "conc"),
            ("KeypointL2Reg", self._kp_reg_metric, 0.1, "reg"),
        ]
        self.no_metriclist_test = True
        self.mixed_precision = False  # TODO(synk): autocast not representable in Pallas
        # jit the whole pipeline once; weights are closure constants.
        self._jit_with_loss = jax.jit(self._run_with_loss)
        self._jit_model_only = jax.jit(self._run_model_only)

    # Metric callables read the sums the fused kernel already produced — the
    # kernel is NOT re-launched per metric.
    def _concentration_metric(self, ddata):
        out = ddata["output"]
        B, K = out["heatmaps"].shape[0], out["heatmaps"].shape[1]
        return out["_conc_sum"] / (B * K)

    def _kp_reg_metric(self, ddata):
        out = ddata["output"]
        B, K = out["heatmaps"].shape[0], out["heatmaps"].shape[1]
        return out["_reg_sum"] / (B * K)

    def get_model_output(self, ddata, mode):
        return self.model(ddata, mode)

    def get_loss(self, ddata):
        metrics = self.metrics_train
        lossdict = {}
        loss = jnp.float32(0.0)
        for (m_name, metric, weight, alias) in metrics:
            loss_i = metric(ddata)
            if not isinstance(loss_i, dict):
                loss_i = {alias: loss_i}
            for k, v in loss_i.items():
                loss = loss + weight * v
            if len(loss_i) == 1:
                lossdict.update({k: v * weight for k, v in loss_i.items()})
            else:
                lossdict.update({alias + "-" + k: v * weight for k, v in loss_i.items()})
        return {"loss": loss, "lossdict": lossdict}

    # --- jitted bodies ---
    def _run_with_loss(self, x):
        ddata = {"image": x}
        model_output = self.get_model_output(ddata, "full_pipeline")
        ddata["output"] = model_output
        loss_output = self.get_loss(ddata)
        return model_output, loss_output

    def _run_model_only(self, x):
        return self.get_model_output({"image": x}, "full_pipeline")

    def forward(self, ddata, mode="full_pipeline", get_loss=True):
        # TODO(synk): `mode` is accepted for API parity; the synthetic base
        #             model ignores it (the real backbones branch on it).
        if get_loss:
            model_output, loss_output = self._jit_with_loss(ddata["image"])
            ddata.update({"output": model_output, "loss": loss_output})
        else:
            model_output = self._jit_model_only(ddata["image"])
            ddata.update({"output": model_output})
        return ddata


# ----------------------------------------------------------------------------
# Pure-JAX reference (for a correctness sanity check)
# ----------------------------------------------------------------------------
def reference_forward(model, x):
    B, C, H, W = x.shape
    S = H * W
    xf = jnp.transpose(x, (0, 2, 3, 1)).reshape(B * S, C)
    h = jnp.maximum(xf @ model.w1 + model.b1, 0.0)
    heat = (h @ model.w2 + model.b2).reshape(B, S, model.K).transpose(0, 2, 1)
    p = jax.nn.softmax(heat, axis=-1)                       # [B, K, S]
    kp = jnp.einsum("bks,sd->bkd", p, model.coords)         # [B, K, 2]
    d2 = jnp.sum((model.coords[None, None] - kp[:, :, None, :]) ** 2, axis=-1)
    conc = jnp.sum(p * d2) / (B * model.K)
    reg = jnp.sum(kp * kp) / (B * model.K)
    loss = 1.0 * conc + 0.1 * reg
    return loss, kp


if __name__ == "__main__":
    key = jax.random.PRNGKey(0)
    k_param, k_data = jax.random.split(key)

    warper = ModelWarperV2Pallas(k_param)

    B, C, H, W = 2, 4, 16, 16
    x = jax.random.normal(k_data, (B, C, H, W), jnp.float32)
    ddata = {"image": x}

    out = warper.forward(ddata, mode="full_pipeline", get_loss=True)
    loss = out["loss"]["loss"]
    jax.block_until_ready(loss)

    ref_loss, ref_kp = reference_forward(warper.model, x)
    assert jnp.allclose(loss, ref_loss, rtol=1e-2, atol=1e-2), (loss, ref_loss)
    assert jnp.allclose(out["output"]["keypoints"], ref_kp, rtol=1e-2, atol=1e-2)
    assert out["output"]["heatmaps"].shape == (B, 8, H, W)
    assert out["output"]["keypoints"].shape == (B, 8, 2)
    # heatmaps (bf16) still normalized per keypoint
    hm_sums = jnp.sum(out["output"]["heatmaps"].astype(jnp.float32), axis=(-2, -1))
    assert jnp.allclose(hm_sums, 1.0, atol=2e-2)

    print("KERNEL_OK")
</pallas_src>

<mosaic_0001>
module attributes {stable_mosaic.version = 11 : i64} {
  func.func @_fused_forward_kernel(%arg0: i32, %arg1: memref<2x4x256xf32, #tpu.memory_space<vmem>>, %arg2: memref<32x4xf32, #tpu.memory_space<vmem>>, %arg3: memref<32x1xf32, #tpu.memory_space<vmem>>, %arg4: memref<8x32xf32, #tpu.memory_space<vmem>>, %arg5: memref<8x1xf32, #tpu.memory_space<vmem>>, %arg6: memref<3x256xf32, #tpu.memory_space<vmem>>, %arg7: memref<2x8x256xbf16, #tpu.memory_space<vmem>>, %arg8: memref<2x9x2xf32, #tpu.memory_space<vmem>>) attributes {dimension_semantics = [#tpu.dimension_semantics<parallel>], iteration_bounds = array<i64: 1>, scalar_prefetch = 0 : i64, scratch_operands = 0 : i64, tpu.core_type = #tpu.core_type<tc>, window_params = [{transform_indices = @transform_0, window_bounds = array<i64: 2, 4, 256>}, {pipeline_mode = #tpu.pipeline_mode<synchronous>, transform_indices = @transform_1, window_bounds = array<i64: 32, 4>}, {pipeline_mode = #tpu.pipeline_mode<synchronous>, transform_indices = @transform_2, window_bounds = array<i64: 32, 1>}, {pipeline_mode = #tpu.pipeline_mode<synchronous>, transform_indices = @transform_3, window_bounds = array<i64: 8, 32>}, {pipeline_mode = #tpu.pipeline_mode<synchronous>, transform_indices = @transform_4, window_bounds = array<i64: 8, 1>}, {pipeline_mode = #tpu.pipeline_mode<synchronous>, transform_indices = @transform_5, window_bounds = array<i64: 3, 256>}, {transform_indices = @transform_6, window_bounds = array<i64: 2, 8, 256>}, {transform_indices = @transform_7, window_bounds = array<i64: 2, 9, 2>}]} {
    %c0 = arith.constant 0 : index
    %c0_0 = arith.constant 0 : index
    %0 = vector.load %arg2[%c0, %c0_0] : memref<32x4xf32, #tpu.memory_space<vmem>>, vector<32x4xf32>
    %c0_1 = arith.constant 0 : index
    %c0_2 = arith.constant 0 : index
    %1 = vector.load %arg3[%c0_1, %c0_2] : memref<32x1xf32, #tpu.memory_space<vmem>>, vector<32x1xf32>
    %c0_3 = arith.constant 0 : index
    %c0_4 = arith.constant 0 : index
    %2 = vector.load %arg4[%c0_3, %c0_4] : memref<8x32xf32, #tpu.memory_space<vmem>>, vector<8x32xf32>
    %c0_5 = arith.constant 0 : index
    %c0_6 = arith.constant 0 : index
    %3 = vector.load %arg5[%c0_5, %c0_6] : memref<8x1xf32, #tpu.memory_space<vmem>>, vector<8x1xf32>
    %c0_7 = arith.constant 0 : index
    %c0_8 = arith.constant 0 : index
    %4 = vector.load %arg6[%c0_7, %c0_8] : memref<3x256xf32, #tpu.memory_space<vmem>>, vector<1x256xf32>
    %c1 = arith.constant 1 : index
    %c0_9 = arith.constant 0 : index
    %5 = vector.load %arg6[%c1, %c0_9] : memref<3x256xf32, #tpu.memory_space<vmem>>, vector<1x256xf32>
    %c2 = arith.constant 2 : index
    %c0_10 = arith.constant 0 : index
    %6 = vector.load %arg6[%c2, %c0_10] : memref<3x256xf32, #tpu.memory_space<vmem>>, vector<1x256xf32>
    %7 = vector.extract_strided_slice %0 {offsets = [0, 0], sizes = [32, 1], strides = [1, 1]} : vector<32x4xf32> to vector<32x1xf32>
    %8 = vector.extract_strided_slice %0 {offsets = [0, 1], sizes = [32, 1], strides = [1, 1]} : vector<32x4xf32> to vector<32x1xf32>
    %9 = vector.extract_strided_slice %0 {offsets = [0, 2], sizes = [32, 1], strides = [1, 1]} : vector<32x4xf32> to vector<32x1xf32>
    %10 = vector.extract_strided_slice %0 {offsets = [0, 3], sizes = [32, 1], strides = [1, 1]} : vector<32x4xf32> to vector<32x1xf32>
    %c0_11 = arith.constant 0 : index
    %c0_12 = arith.constant 0 : index
    %c0_13 = arith.constant 0 : index
    %11 = vector.load %arg1[%c0_11, %c0_12, %c0_13] : memref<2x4x256xf32, #tpu.memory_space<vmem>>, vector<1x4x256xf32>
    %12 = vector.shape_cast %11 : vector<1x4x256xf32> to vector<4x256xf32>
    %13 = vector.extract_strided_slice %12 {offsets = [0, 0], sizes = [1, 256], strides = [1, 1]} : vector<4x256xf32> to vector<1x256xf32>
    %14 = vector.broadcast %7 : vector<32x1xf32> to vector<32x256xf32>
    %15 = vector.broadcast %13 : vector<1x256xf32> to vector<32x256xf32>
    %16 = arith.mulf %14, %15 : vector<32x256xf32>
    %17 = vector.broadcast %1 : vector<32x1xf32> to vector<32x256xf32>
    %18 = arith.addf %16, %17 : vector<32x256xf32>
    %19 = vector.extract_strided_slice %12 {offsets = [1, 0], sizes = [1, 256], strides = [1, 1]} : vector<4x256xf32> to vector<1x256xf32>
    %20 = vector.broadcast %8 : vector<32x1xf32> to vector<32x256xf32>
    %21 = vector.broadcast %19 : vector<1x256xf32> to vector<32x256xf32>
    %22 = arith.mulf %20, %21 : vector<32x256xf32>
    %23 = arith.addf %18, %22 : vector<32x256xf32>
    %24 = vector.extract_strided_slice %12 {offsets = [2, 0], sizes = [1, 256], strides = [1, 1]} : vector<4x256xf32> to vector<1x256xf32>
    %25 = vector.broadcast %9 : vector<32x1xf32> to vector<32x256xf32>
    %26 = vector.broadcast %24 : vector<1x256xf32> to vector<32x256xf32>
    %27 = arith.mulf %25, %26 : vector<32x256xf32>
    %28 = arith.addf %23, %27 : vector<32x256xf32>
    %29 = vector.extract_strided_slice %12 {offsets = [3, 0], sizes = [1, 256], strides = [1, 1]} : vector<4x256xf32> to vector<1x256xf32>
    %30 = vector.broadcast %10 : vector<32x1xf32> to vector<32x256xf32>
    %31 = vector.broadcast %29 : vector<1x256xf32> to vector<32x256xf32>
    %32 = arith.mulf %30, %31 : vector<32x256xf32>
    %33 = arith.addf %28, %32 : vector<32x256xf32>
    %cst = arith.constant 0.000000e+00 : f32
    %34 = vector.broadcast %cst : f32 to vector<32x256xf32>
    %35 = arith.maximumf %33, %34 : vector<32x256xf32>
    %cst_14 = arith.constant dense<0.000000e+00> : vector<8x256xf32>
    %36 = tpu.matmul %2, %35, %cst_14 {dimension_numbers = #tpu.dot_dimension_numbers<[1], [0], [0], [1], [0, 0, 1, 1], [], []>} : vector<8x32xf32>, vector<32x256xf32>, vector<8x256xf32> -> vector<8x256xf32>
    %37 = vector.broadcast %3 : vector<8x1xf32> to vector<8x256xf32>
    %38 = arith.addf %36, %37 : vector<8x256xf32>
    %cst_15 = arith.constant dense<0xFF800000> : vector<8xf32>
    %39 = vector.multi_reduction <maximumf>, %38, %cst_15 [1] : vector<8x256xf32> to vector<8xf32>
    %40 = vector.shape_cast %39 : vector<8xf32> to vector<8x1xf32>
    %41 = vector.broadcast %40 : vector<8x1xf32> to vector<8x256xf32>
    %42 = arith.subf %38, %41 : vector<8x256xf32>
    %43 = math.exp %42 : vector<8x256xf32>
    %cst_16 = arith.constant dense<0.000000e+00> : vector<8xf32>
    %44 = vector.multi_reduction <add>, %43, %cst_16 [1] : vector<8x256xf32> to vector<8xf32>
    %45 = vector.shape_cast %44 : vector<8xf32> to vector<8x1xf32>
    %cst_17 = arith.constant 1.000000e+00 : f32
    %46 = vector.broadcast %cst_17 : f32 to vector<8x1xf32>
    %47 = arith.divf %46, %45 : vector<8x1xf32>
    %48 = vector.broadcast %47 : vector<8x1xf32> to vector<8x256xf32>
    %49 = arith.mulf %43, %48 : vector<8x256xf32>
    %50 = arith.truncf %49 : vector<8x256xf32> to vector<8x256xbf16>
    %c0_18 = arith.constant 0 : index
    %c0_19 = arith.constant 0 : index
    %c0_20 = arith.constant 0 : index
    %51 = vector.load %arg7[%c0_18, %c0_19, %c0_20] : memref<2x8x256xbf16, #tpu.memory_space<vmem>>, vector<1x8x256xbf16>
    %52 = vector.shape_cast %51 : vector<1x8x256xbf16> to vector<8x256xbf16>
    %53 = vector.shape_cast %50 : vector<8x256xbf16> to vector<1x8x256xbf16>
    tpu.vector_store %arg7[%c0_18, %c0_19, %c0_20], %53 {strides = array<i32>} : memref<2x8x256xbf16, #tpu.memory_space<vmem>>, vector<1x8x256xbf16>,
    %54 = vector.broadcast %4 : vector<1x256xf32> to vector<8x256xf32>
    %55 = arith.mulf %43, %54 : vector<8x256xf32>
    %cst_21 = arith.constant dense<0.000000e+00> : vector<8xf32>
    %56 = vector.multi_reduction <add>, %55, %cst_21 [1] : vector<8x256xf32> to vector<8xf32>
    %57 = vector.shape_cast %56 : vector<8xf32> to vector<8x1xf32>
    %58 = arith.mulf %47, %57 : vector<8x1xf32>
    %59 = vector.broadcast %5 : vector<1x256xf32> to vector<8x256xf32>
    %60 = arith.mulf %43, %59 : vector<8x256xf32>
    %cst_22 = arith.constant dense<0.000000e+00> : vector<8xf32>
    %61 = vector.multi_reduction <add>, %60, %cst_22 [1] : vector<8x256xf32> to vector<8xf32>
    %62 = vector.shape_cast %61 : vector<8xf32> to vector<8x1xf32>
    %63 = arith.mulf %47, %62 : vector<8x1xf32>
    %64 = arith.mulf %58, %58 : vector<8x1xf32>
    %65 = arith.mulf %63, %63 : vector<8x1xf32>
    %66 = arith.addf %64, %65 : vector<8x1xf32>
    %67 = vector.broadcast %6 : vector<1x256xf32> to vector<8x256xf32>
    %68 = arith.mulf %43, %67 : vector<8x256xf32>
    %cst_23 = arith.constant dense<0.000000e+00> : vector<8xf32>
    %69 = vector.multi_reduction <add>, %68, %cst_23 [1] : vector<8x256xf32> to vector<8xf32>
    %70 = vector.shape_cast %69 : vector<8xf32> to vector<8x1xf32>
    %71 = arith.mulf %47, %70 : vector<8x1xf32>
    %72 = arith.subf %71, %66 : vector<8x1xf32>
    %cst_24 = arith.constant dense<0.000000e+00> : vector<1xf32>
    %73 = vector.multi_reduction <add>, %72, %cst_24 [0] : vector<8x1xf32> to vector<1xf32>
    %74 = vector.shape_cast %73 : vector<1xf32> to vector<1x1xf32>
    %cst_25 = arith.constant dense<0.000000e+00> : vector<1xf32>
    %75 = vector.multi_reduction <add>, %66, %cst_25 [0] : vector<8x1xf32> to vector<1xf32>
    %76 = vector.shape_cast %75 : vector<1xf32> to vector<1x1xf32>
    %77 = tpu.iota {dimensions = array<i32: 1>} : vector<8x2xi32>
    %c0_i32 = arith.constant 0 : i32
    %78 = vector.broadcast %c0_i32 : i32 to vector<8x2xi32>
    %79 = arith.cmpi eq, %77, %78 : vector<8x2xi32>
    %80 = vector.shape_cast %58 : vector<8x1xf32> to vector<8x1xf32>
    %81 = vector.broadcast %80 : vector<8x1xf32> to vector<8x2xf32>
    %82 = vector.shape_cast %63 : vector<8x1xf32> to vector<8x1xf32>
    %83 = vector.broadcast %82 : vector<8x1xf32> to vector<8x2xf32>
    %84 = arith.select %79, %81, %83 : vector<8x2xi1>, vector<8x2xf32>
    %c0_26 = arith.constant 0 : index
    %c0_27 = arith.constant 0 : index
    %c0_28 = arith.constant 0 : index
    %85 = vector.load %arg8[%c0_26, %c0_27, %c0_28] : memref<2x9x2xf32, #tpu.memory_space<vmem>>, vector<1x8x2xf32>
    %86 = vector.shape_cast %85 : vector<1x8x2xf32> to vector<8x2xf32>
    %87 = vector.shape_cast %84 : vector<8x2xf32> to vector<1x8x2xf32>
    tpu.vector_store %arg8[%c0_26, %c0_27, %c0_28], %87 {strides = array<i32>} : memref<2x9x2xf32, #tpu.memory_space<vmem>>, vector<1x8x2xf32>,
    %88 = tpu.iota {dimensions = array<i32: 1>} : vector<1x2xi32>
    %c0_i32_29 = arith.constant 0 : i32
    %89 = vector.broadcast %c0_i32_29 : i32 to vector<1x2xi32>
    %90 = arith.cmpi eq, %88, %89 : vector<1x2xi32>
    %91 = vector.shape_cast %74 : vector<1x1xf32> to vector<1x1xf32>
    %92 = vector.broadcast %91 : vector<1x1xf32> to vector<1x2xf32>
    %93 = vector.shape_cast %76 : vector<1x1xf32> to vector<1x1xf32>
    %94 = vector.broadcast %93 : vector<1x1xf32> to vector<1x2xf32>
    %95 = arith.select %90, %92, %94 : vector<1x2xi1>, vector<1x2xf32>
    %c0_30 = arith.constant 0 : index
    %c8 = arith.constant 8 : index
    %c0_31 = arith.constant 0 : index
    %96 = vector.load %arg8[%c0_30, %c8, %c0_31] : memref<2x9x2xf32, #tpu.memory_space<vmem>>, vector<1x1x2xf32>
    %97 = vector.shape_cast %96 : vector<1x1x2xf32> to vector<1x2xf32>
    %98 = vector.shape_cast %95 : vector<1x2xf32> to vector<1x1x2xf32>
    tpu.vector_store %arg8[%c0_30, %c8, %c0_31], %98 {strides = array<i32>} : memref<2x9x2xf32, #tpu.memory_space<vmem>>, vector<1x1x2xf32>,
    %c1_32 = arith.constant 1 : index
    %c0_33 = arith.constant 0 : index
    %c0_34 = arith.constant 0 : index
    %99 = vector.load %arg1[%c1_32, %c0_33, %c0_34] : memref<2x4x256xf32, #tpu.memory_space<vmem>>, vector<1x4x256xf32>
    %100 = vector.shape_cast %99 : vector<1x4x256xf32> to vector<4x256xf32>
    %101 = vector.extract_strided_slice %100 {offsets = [0, 0], sizes = [1, 256], strides = [1, 1]} : vector<4x256xf32> to vector<1x256xf32>
    %102 = vector.broadcast %7 : vector<32x1xf32> to vector<32x256xf32>
    %103 = vector.broadcast %101 : vector<1x256xf32> to vector<32x256xf32>
    %104 = arith.mulf %102, %103 : vector<32x256xf32>
    %105 = vector.broadcast %1 : vector<32x1xf32> to vector<32x256xf32>
    %106 = arith.addf %104, %105 : vector<32x256xf32>
    %107 = vector.extract_strided_slice %100 {offsets = [1, 0], sizes = [1, 256], strides = [1, 1]} : vector<4x256xf32> to vector<1x256xf32>
    %108 = vector.broadcast %8 : vector<32x1xf32> to vector<32x256xf32>
    %109 = vector.broadcast %107 : vector<1x256xf32> to vector<32x256xf32>
    %110 = arith.mulf %108, %109 : vector<32x256xf32>
    %111 = arith.addf %106, %110 : vector<32x256xf32>
    %112 = vector.extract_strided_slice %100 {offsets = [2, 0], sizes = [1, 256], strides = [1, 1]} : vector<4x256xf32> to vector<1x256xf32>
    %113 = vector.broadcast %9 : vector<32x1xf32> to vector<32x256xf32>
    %114 = vector.broadcast %112 : vector<1x256xf32> to vector<32x256xf32>
    %115 = arith.mulf %113, %114 : vector<32x256xf32>
    %116 = arith.addf %111, %115 : vector<32x256xf32>
    %117 = vector.extract_strided_slice %100 {offsets = [3, 0], sizes = [1, 256], strides = [1, 1]} : vector<4x256xf32> to vector<1x256xf32>
    %118 = vector.broadcast %10 : vector<32x1xf32> to vector<32x256xf32>
    %119 = vector.broadcast %117 : vector<1x256xf32> to vector<32x256xf32>
    %120 = arith.mulf %118, %119 : vector<32x256xf32>
    %121 = arith.addf %116, %120 : vector<32x256xf32>
    %cst_35 = arith.constant 0.000000e+00 : f32
    %122 = vector.broadcast %cst_35 : f32 to vector<32x256xf32>
    %123 = arith.maximumf %121, %122 : vector<32x256xf32>
    %cst_36 = arith.constant dense<0.000000e+00> : vector<8x256xf32>
    %124 = tpu.matmul %2, %123, %cst_36 {dimension_numbers = #tpu.dot_dimension_numbers<[1], [0], [0], [1], [0, 0, 1, 1], [], []>} : vector<8x32xf32>, vector<32x256xf32>, vector<8x256xf32> -> vector<8x256xf32>
    %125 = vector.broadcast %3 : vector<8x1xf32> to vector<8x256xf32>
    %126 = arith.addf %124, %125 : vector<8x256xf32>
    %cst_37 = arith.constant dense<0xFF800000> : vector<8xf32>
    %127 = vector.multi_reduction <maximumf>, %126, %cst_37 [1] : vector<8x256xf32> to vector<8xf32>
    %128 = vector.shape_cast %127 : vector<8xf32> to vector<8x1xf32>
    %129 = vector.broadcast %128 : vector<8x1xf32> to vector<8x256xf32>
    %130 = arith.subf %126, %129 : vector<8x256xf32>
    %131 = math.exp %130 : vector<8x256xf32>
    %cst_38 = arith.constant dense<0.000000e+00> : vector<8xf32>
    %132 = vector.multi_reduction <add>, %131, %cst_38 [1] : vector<8x256xf32> to vector<8xf32>
    %133 = vector.shape_cast %132 : vector<8xf32> to vector<8x1xf32>
    %cst_39 = arith.constant 1.000000e+00 : f32
    %134 = vector.broadcast %cst_39 : f32 to vector<8x1xf32>
    %135 = arith.divf %134, %133 : vector<8x1xf32>
    %136 = vector.broadcast %135 : vector<8x1xf32> to vector<8x256xf32>
    %137 = arith.mulf %131, %136 : vector<8x256xf32>
    %138 = arith.truncf %137 : vector<8x256xf32> to vector<8x256xbf16>
    %c1_40 = arith.constant 1 : index
    %c0_41 = arith.constant 0 : index
    %c0_42 = arith.constant 0 : index
    %139 = vector.load %arg7[%c1_40, %c0_41, %c0_42] : memref<2x8x256xbf16, #tpu.memory_space<vmem>>, vector<1x8x256xbf16>
    %140 = vector.shape_cast %139 : vector<1x8x256xbf16> to vector<8x256xbf16>
    %141 = vector.shape_cast %138 : vector<8x256xbf16> to vector<1x8x256xbf16>
    tpu.vector_store %arg7[%c1_40, %c0_41, %c0_42], %141 {strides = array<i32>} : memref<2x8x256xbf16, #tpu.memory_space<vmem>>, vector<1x8x256xbf16>,
    %142 = vector.broadcast %4 : vector<1x256xf32> to vector<8x256xf32>
    %143 = arith.mulf %131, %142 : vector<8x256xf32>
    %cst_43 = arith.constant dense<0.000000e+00> : vector<8xf32>
    %144 = vector.multi_reduction <add>, %143, %cst_43 [1] : vector<8x256xf32> to vector<8xf32>
    %145 = vector.shape_cast %144 : vector<8xf32> to vector<8x1xf32>
    %146 = arith.mulf %135, %145 : vector<8x1xf32>
    %147 = vector.broadcast %5 : vector<1x256xf32> to vector<8x256xf32>
    %148 = arith.mulf %131, %147 : vector<8x256xf32>
    %cst_44 = arith.constant dense<0.000000e+00> : vector<8xf32>
    %149 = vector.multi_reduction <add>, %148, %cst_44 [1] : vector<8x256xf32> to vector<8xf32>
    %150 = vector.shape_cast %149 : vector<8xf32> to vector<8x1xf32>
    %151 = arith.mulf %135, %150 : vector<8x1xf32>
    %152 = arith.mulf %146, %146 : vector<8x1xf32>
    %153 = arith.mulf %151, %151 : vector<8x1xf32>
    %154 = arith.addf %152, %153 : vector<8x1xf32>
    %155 = vector.broadcast %6 : vector<1x256xf32> to vector<8x256xf32>
    %156 = arith.mulf %131, %155 : vector<8x256xf32>
    %cst_45 = arith.constant dense<0.000000e+00> : vector<8xf32>
    %157 = vector.multi_reduction <add>, %156, %cst_45 [1] : vector<8x256xf32> to vector<8xf32>
    %158 = vector.shape_cast %157 : vector<8xf32> to vector<8x1xf32>
    %159 = arith.mulf %135, %158 : vector<8x1xf32>
    %160 = arith.subf %159, %154 : vector<8x1xf32>
    %cst_46 = arith.constant dense<0.000000e+00> : vector<1xf32>
    %161 = vector.multi_reduction <add>, %160, %cst_46 [0] : vector<8x1xf32> to vector<1xf32>
    %162 = vector.shape_cast %161 : vector<1xf32> to vector<1x1xf32>
    %cst_47 = arith.constant dense<0.000000e+00> : vector<1xf32>
    %163 = vector.multi_reduction <add>, %154, %cst_47 [0] : vector<8x1xf32> to vector<1xf32>
    %164 = vector.shape_cast %163 : vector<1xf32> to vector<1x1xf32>
    %165 = tpu.iota {dimensions = array<i32: 1>} : vector<8x2xi32>
    %c0_i32_48 = arith.constant 0 : i32
    %166 = vector.broadcast %c0_i32_48 : i32 to vector<8x2xi32>
    %167 = arith.cmpi eq, %165, %166 : vector<8x2xi32>
    %168 = vector.shape_cast %146 : vector<8x1xf32> to vector<8x1xf32>
    %169 = vector.broadcast %168 : vector<8x1xf32> to vector<8x2xf32>
    %170 = vector.shape_cast %151 : vector<8x1xf32> to vector<8x1xf32>
    %171 = vector.broadcast %170 : vector<8x1xf32> to vector<8x2xf32>
    %172 = arith.select %167, %169, %171 : vector<8x2xi1>, vector<8x2xf32>
    %c1_49 = arith.constant 1 : index
    %c0_50 = arith.constant 0 : index
    %c0_51 = arith.constant 0 : index
    %173 = vector.load %arg8[%c1_49, %c0_50, %c0_51] : memref<2x9x2xf32, #tpu.memory_space<vmem>>, vector<1x8x2xf32>
    %174 = vector.shape_cast %173 : vector<1x8x2xf32> to vector<8x2xf32>
    %175 = vector.shape_cast %172 : vector<8x2xf32> to vector<1x8x2xf32>
    tpu.vector_store %arg8[%c1_49, %c0_50, %c0_51], %175 {strides = array<i32>} : memref<2x9x2xf32, #tpu.memory_space<vmem>>, vector<1x8x2xf32>,
    %176 = tpu.iota {dimensions = array<i32: 1>} : vector<1x2xi32>
    %c0_i32_52 = arith.constant 0 : i32
    %177 = vector.broadcast %c0_i32_52 : i32 to vector<1x2xi32>
    %178 = arith.cmpi eq, %176, %177 : vector<1x2xi32>
    %179 = vector.shape_cast %162 : vector<1x1xf32> to vector<1x1xf32>
    %180 = vector.broadcast %179 : vector<1x1xf32> to vector<1x2xf32>
    %181 = vector.shape_cast %164 : vector<1x1xf32> to vector<1x1xf32>
    %182 = vector.broadcast %181 : vector<1x1xf32> to vector<1x2xf32>
    %183 = arith.select %178, %180, %182 : vector<1x2xi1>, vector<1x2xf32>
    %c1_53 = arith.constant 1 : index
    %c8_54 = arith.constant 8 : index
    %c0_55 = arith.constant 0 : index
    %184 = vector.load %arg8[%c1_53, %c8_54, %c0_55] : memref<2x9x2xf32, #tpu.memory_space<vmem>>, vector<1x1x2xf32>
    %185 = vector.shape_cast %184 : vector<1x1x2xf32> to vector<1x2xf32>
    %186 = vector.shape_cast %183 : vector<1x2xf32> to vector<1x1x2xf32>
    tpu.vector_store %arg8[%c1_53, %c8_54, %c0_55], %186 {strides = array<i32>} : memref<2x9x2xf32, #tpu.memory_space<vmem>>, vector<1x1x2xf32>,
    return
  }
  func.func @transform_0(%arg0: i32) -> (i32, i32, i32) {
    %c0_i32 = arith.constant 0 : i32
    %c0_i32_0 = arith.constant 0 : i32
    %c0_i32_1 = arith.constant 0 : i32
    return %arg0, %c0_i32, %c0_i32_0 : i32, i32, i32
  }
  func.func @transform_1(%arg0: i32) -> (i32, i32) {
    %c0_i32 = arith.constant 0 : i32
    %c0_i32_0 = arith.constant 0 : i32
    %c0_i32_1 = arith.constant 0 : i32
    return %c0_i32, %c0_i32_0 : i32, i32
  }
  func.func @transform_2(%arg0: i32) -> (i32, i32) {
    %c0_i32 = arith.constant 0 : i32
    %c0_i32_0 = arith.constant 0 : i32
    %c0_i32_1 = arith.constant 0 : i32
    return %c0_i32, %c0_i32_0 : i32, i32
  }
  func.func @transform_3(%arg0: i32) -> (i32, i32) {
    %c0_i32 = arith.constant 0 : i32
    %c0_i32_0 = arith.constant 0 : i32
    %c0_i32_1 = arith.constant 0 : i32
    return %c0_i32, %c0_i32_0 : i32, i32
  }
  func.func @transform_4(%arg0: i32) -> (i32, i32) {
    %c0_i32 = arith.constant 0 : i32
    %c0_i32_0 = arith.constant 0 : i32
    %c0_i32_1 = arith.constant 0 : i32
    return %c0_i32, %c0_i32_0 : i32, i32
  }
  func.func @transform_5(%arg0: i32) -> (i32, i32) {
    %c0_i32 = arith.constant 0 : i32
    %c0_i32_0 = arith.constant 0 : i32
    %c0_i32_1 = arith.constant 0 : i32
    return %c0_i32, %c0_i32_0 : i32, i32
  }
  func.func @transform_6(%arg0: i32) -> (i32, i32, i32) {
    %c0_i32 = arith.constant 0 : i32
    %c0_i32_0 = arith.constant 0 : i32
    %c0_i32_1 = arith.constant 0 : i32
    return %arg0, %c0_i32, %c0_i32_0 : i32, i32, i32
  }
  func.func @transform_7(%arg0: i32) -> (i32, i32, i32) {
    %c0_i32 = arith.constant 0 : i32
    %c0_i32_0 = arith.constant 0 : i32
    %c0_i32_1 = arith.constant 0 : i32
    return %arg0, %c0_i32, %c0_i32_0 : i32, i32, i32
  }
}

</mosaic_0001>

<llo_original>
// kernel: _run_with_loss.1
$region0: #{_run_with_loss.1}
  #allocation0 [shape = 'u32[]', space=smem, size = 0x4, offset = 0x4, fixed_abs, tag = 'smem constant byte address 0x4 - core index']
  #allocation1 [shape = 'u32[72,128]{1,0:T(1,128)}', space=vmem, size = 0x9000, scoped, tag = 'internal scratch']
  %s0 = inlined_call_operand.vmem [shape: f32[2,4,256], index: 0, kind: input, shape index: {}]
  %s1 = inlined_call_operand.vmem [shape: f32[32,4], index: 1, kind: input, shape index: {}]
  %s2 = inlined_call_operand.vmem [shape: f32[32,1], index: 2, kind: input, shape index: {}]
  %s3 = inlined_call_operand.vmem [shape: f32[8,32], index: 3, kind: input, shape index: {}]
  %s4 = inlined_call_operand.vmem [shape: f32[8,1], index: 4, kind: input, shape index: {}]
  %s5 = inlined_call_operand.vmem [shape: f32[3,256], index: 5, kind: input, shape index: {}]
  %s6 = inlined_call_operand.vmem [shape: bf16[2,8,256], index: 6, kind: output, shape index: {0}]
  %s7 = inlined_call_operand.vmem [shape: f32[2,9,2], index: 7, kind: output, shape index: {1}]
  %8 = xla_tuple %s6, %s7
  %s9 = sld [smem:[#allocation0]]
  $region42: #{_run_with_loss.1} parent=0
    _
  %s11 = ssub.s32 1, %s9
  %s12 = scalar_select 0, %s11, %s9
  // Predicated region
  $region2: #{_run_with_loss.1} parent=0 // pred_check
    _
  $region3: #{_run_with_loss.1} parent=0 // pred_check_branch
    %14 = sbr.rel (0) target = $region5
  $region4: #{_run_with_loss.1} parent=0 // pred_region
    _
  $region5: #{_run_with_loss.1} parent=0 // pred_fallthru
    _
  // Predicated region
  $region6: #{_run_with_loss.1} parent=0 // pred_check
    _
  $region7: #{_run_with_loss.1} parent=0 // pred_check_branch
    %16 = sbr.rel (0) target = $region9
  $region8: #{_run_with_loss.1} parent=0 // pred_region
    _
  $region9: #{_run_with_loss.1} parent=0 // pred_fallthru
    _
  // Predicated region
  $region10: #{_run_with_loss.1} parent=0 // pred_check
    _
  $region11: #{_run_with_loss.1} parent=0 // pred_check_branch
    %18 = sbr.rel (0) target = $region13
  $region12: #{_run_with_loss.1} parent=0 // pred_region
    _
  $region13: #{_run_with_loss.1} parent=0 // pred_fallthru
    _
  // Predicated region
  $region14: #{_run_with_loss.1} parent=0 // pred_check
    _
  $region15: #{_run_with_loss.1} parent=0 // pred_check_branch
    %20 = sbr.rel (0) target = $region17
  $region16: #{_run_with_loss.1} parent=0 // pred_region
    _
  $region17: #{_run_with_loss.1} parent=0 // pred_fallthru
    _
  // Predicated region
  $region18: #{_run_with_loss.1} parent=0 // pred_check
    _
  $region19: #{_run_with_loss.1} parent=0 // pred_check_branch
    %22 = sbr.rel (0) target = $region21
  $region20: #{_run_with_loss.1} parent=0 // pred_region
    _
  $region21: #{_run_with_loss.1} parent=0 // pred_fallthru
    _
  // Predicated region
  $region22: #{_run_with_loss.1} parent=0 // pred_check
    _
  $region23: #{_run_with_loss.1} parent=0 // pred_check_branch
    %24 = sbr.rel (0) target = $region25
  $region24: #{_run_with_loss.1} parent=0 // pred_region
    _
  $region25: #{_run_with_loss.1} parent=0 // pred_fallthru
    _
  %v25 = vld [vmem:[%s1] sm:$0xff]
  %v26 = vld [vmem:[%s1 + $0x8] sm:$0xff]
  %v27 = vld [vmem:[%s1 + $0x10] sm:$0xff]
  %v28 = vld [vmem:[%s1 + $0x18] sm:$0xff]
  %v29 = vld [vmem:[%s2] sm:$0xff]
  %v30 = vld [vmem:[%s2 + $0x8] sm:$0xff]
  %v31 = vld [vmem:[%s2 + $0x10] sm:$0xff]
  %v32 = vld [vmem:[%s2 + $0x18] sm:$0xff]
  %v33 = vld [vmem:[%s3] sm:$0xff]
  %v34 = vld [vmem:[%s4] sm:$0xff]
  %v35 = vld [vmem:[%s5] ss:$4 sm:$0x3]
  %s36 = scalar_lea.vmem %s5, 1
  %v37 = vld [vmem:[%s36] ss:$4 sm:$0x3]
  %s38 = scalar_lea.vmem %s5, 2
  %v39 = vld [vmem:[%s38] ss:$4 sm:$0x3]
  %v40 = vld [vmem:[%s0] sm:$0xff]
  %42 = vset.pattern.permute.xlu0 0
  %43 = vperm.xlu0 %42, %v25
  %v44 = vpop.permute.xlu0 %43
  %47 = vset.pattern.permute.xlu0 0
  %48 = vperm.xlu0 %47, %v26
  %v49 = vpop.permute.xlu0 %48
  %52 = vset.pattern.permute.xlu0 0
  %53 = vperm.xlu0 %52, %v27
  %v54 = vpop.permute.xlu0 %53
  %57 = vset.pattern.permute.xlu0 0
  %58 = vperm.xlu0 %57, %v28
  %v59 = vpop.permute.xlu0 %58
  %v62 = vperm.slane %v40, 0
  %v63 = vperm.slane %v40, 4
  %v66 = vperm.slane %v62, 0
  %v67 = vperm.slane %v63, 0
  %v68 = vmul.f32 %v44, %v66
  %v69 = vmul.f32 %v44, %v67
  %v70 = vmul.f32 %v49, %v66
  %v71 = vmul.f32 %v49, %v67
  %v72 = vmul.f32 %v54, %v66
  %v73 = vmul.f32 %v54, %v67
  %v74 = vmul.f32 %v59, %v66
  %v75 = vmul.f32 %v59, %v67
  %77 = vset.pattern.permute.xlu0 0
  %78 = vperm.xlu0 %77, %v29
  %v79 = vpop.permute.xlu0 %78
  %82 = vset.pattern.permute.xlu0 0
  %83 = vperm.xlu0 %82, %v30
  %v84 = vpop.permute.xlu0 %83
  %87 = vset.pattern.permute.xlu0 0
  %88 = vperm.xlu0 %87, %v31
  %v89 = vpop.permute.xlu0 %88
  %92 = vset.pattern.permute.xlu0 0
  %93 = vperm.xlu0 %92, %v32
  %v94 = vpop.permute.xlu0 %93
  %v96 = vadd.f32 %v68, %v79
  %v97 = vadd.f32 %v69, %v79
  %v98 = vadd.f32 %v70, %v84
  %v99 = vadd.f32 %v71, %v84
  %v100 = vadd.f32 %v72, %v89
  %v101 = vadd.f32 %v73, %v89
  %v102 = vadd.f32 %v74, %v94
  %v103 = vadd.f32 %v75, %v94
  %104 = vset.pattern.permute.xlu0 1
  %105 = vperm.xlu0 %104, %v25
  %v106 = vpop.permute.xlu0 %105
  %108 = vset.pattern.permute.xlu0 1
  %109 = vperm.xlu0 %108, %v26
  %v110 = vpop.permute.xlu0 %109
  %112 = vset.pattern.permute.xlu0 1
  %113 = vperm.xlu0 %112, %v27
  %v114 = vpop.permute.xlu0 %113
  %116 = vset.pattern.permute.xlu0 1
  %117 = vperm.xlu0 %116, %v28
  %v118 = vpop.permute.xlu0 %117
  %v120 = vperm.slane %v40, 1
  %v121 = vperm.slane %v40, 5
  %v124 = vperm.slane %v120, 1
  %v125 = vperm.slane %v121, 1
  %v126 = vmul.f32 %v106, %v124
  %v127 = vmul.f32 %v106, %v125
  %v128 = vmul.f32 %v110, %v124
  %v129 = vmul.f32 %v110, %v125
  %v130 = vmul.f32 %v114, %v124
  %v131 = vmul.f32 %v114, %v125
  %v132 = vmul.f32 %v118, %v124
  %v133 = vmul.f32 %v118, %v125
  %v134 = vadd.f32 %v96, %v126
  %v135 = vadd.f32 %v97, %v127
  %v136 = vadd.f32 %v98, %v128
  %v137 = vadd.f32 %v99, %v129
  %v138 = vadd.f32 %v100, %v130
  %v139 = vadd.f32 %v101, %v131
  %v140 = vadd.f32 %v102, %v132
  %v141 = vadd.f32 %v103, %v133
  %142 = vset.pattern.permute.xlu0 2
  %143 = vperm.xlu0 %142, %v25
  %v144 = vpop.permute.xlu0 %143
  %146 = vset.pattern.permute.xlu0 2
  %147 = vperm.xlu0 %146, %v26
  %v148 = vpop.permute.xlu0 %147
  %150 = vset.pattern.permute.xlu0 2
  %151 = vperm.xlu0 %150, %v27
  %v152 = vpop.permute.xlu0 %151
  %154 = vset.pattern.permute.xlu0 2
  %155 = vperm.xlu0 %154, %v28
  %v156 = vpop.permute.xlu0 %155
  %v158 = vperm.slane %v40, 2
  %v159 = vperm.slane %v40, 6
  %v162 = vperm.slane %v158, 2
  %v163 = vperm.slane %v159, 2
  %v164 = vmul.f32 %v144, %v162
  %v165 = vmul.f32 %v144, %v163
  %v166 = vmul.f32 %v148, %v162
  %v167 = vmul.f32 %v148, %v163
  %v168 = vmul.f32 %v152, %v162
  %v169 = vmul.f32 %v152, %v163
  %v170 = vmul.f32 %v156, %v162
  %v171 = vmul.f32 %v156, %v163
  %v172 = vadd.f32 %v134, %v164
  %v173 = vadd.f32 %v135, %v165
  %v174 = vadd.f32 %v136, %v166
  %v175 = vadd.f32 %v137, %v167
  %v176 = vadd.f32 %v138, %v168
  %v177 = vadd.f32 %v139, %v169
  %v178 = vadd.f32 %v140, %v170
  %v179 = vadd.f32 %v141, %v171
  %180 = vset.pattern.permute.xlu0 3
  %181 = vperm.xlu0 %180, %v25
  %v182 = vpop.permute.xlu0 %181
  %184 = vset.pattern.permute.xlu0 3
  %185 = vperm.xlu0 %184, %v26
  %v186 = vpop.permute.xlu0 %185
  %188 = vset.pattern.permute.xlu0 3
  %189 = vperm.xlu0 %188, %v27
  %v190 = vpop.permute.xlu0 %189
  %192 = vset.pattern.permute.xlu0 3
  %193 = vperm.xlu0 %192, %v28
  %v194 = vpop.permute.xlu0 %193
  %v196 = vperm.slane %v40, 3
  %v197 = vperm.slane %v40, 7
  %v200 = vperm.slane %v196, 3
  %v201 = vperm.slane %v197, 3
  %v202 = vmul.f32 %v182, %v200
  %v203 = vmul.f32 %v182, %v201
  %v204 = vmul.f32 %v186, %v200
  %v205 = vmul.f32 %v186, %v201
  %v206 = vmul.f32 %v190, %v200
  %v207 = vmul.f32 %v190, %v201
  %v208 = vmul.f32 %v194, %v200
  %v209 = vmul.f32 %v194, %v201
  %v210 = vadd.f32 %v172, %v202
  %v211 = vadd.f32 %v173, %v203
  %v212 = vadd.f32 %v174, %v204
  %v213 = vadd.f32 %v175, %v205
  %v214 = vadd.f32 %v176, %v206
  %v215 = vadd.f32 %v177, %v207
  %v216 = vadd.f32 %v178, %v208
  %v217 = vadd.f32 %v179, %v209
  %v218 = vmax.f32 %v210, 0.0
  %v219 = vmax.f32 %v211, 0.0
  %v220 = vmax.f32 %v212, 0.0
  %v221 = vmax.f32 %v213, 0.0
  %v222 = vmax.f32 %v214, 0.0
  %v223 = vmax.f32 %v215, 0.0
  %v224 = vmax.f32 %v216, 0.0
  %v225 = vmax.f32 %v217, 0.0
  %227 = vset.pattern.permute.xlu0 0
  %228 = vperm.xlu0 %227, %v34
  %v229 = vpop.permute.xlu0 %228
  %vm231 = vcmask 261120
  %v233 = vsel %vm231, %v33, 0
  %235 = vmatpush.msra.mxu0 0.0
  %236 = vmatpush.msra.mxu0 0.0
  %237 = vmatpush.msra.mxu0 0.0
  %238 = vmatpush.msra.mxu0 0.0
  %239 = vmatpush.msra.mxu0 0.0
  %240 = vmatpush.msra.mxu0 0.0
  %241 = vmatpush.msra.mxu0 0.0
  %242 = vmatpush.msra.mxu0 0.0
  %243 = vmatpush.msra.mxu0 0.0
  %244 = vmatpush.msra.mxu0 0.0
  %245 = vmatpush.msra.mxu0 0.0
  %246 = vmatpush.msra.mxu0 0.0
  %247 = vmatpush.msra.mxu0 %v224
  %248 = vmatpush.msra.mxu0 %v222
  %249 = vmatpush.msra.mxu0 %v220
  %250 = vmatpush.msra.mxu0 %v218
  %251 = vmatmul.f32.gmra.mxu0 %v233
  %v252 = vpop.f32.mrf.mxu0
  %v253 = vadd.f32 %v229, %v252
  %254 = vdwg.mxu0
  %255 = vmatpush.msra.mxu0 0.0
  %256 = vmatpush.msra.mxu0 0.0
  %257 = vmatpush.msra.mxu0 0.0
  %258 = vmatpush.msra.mxu0 0.0
  %259 = vmatpush.msra.mxu0 0.0
  %260 = vmatpush.msra.mxu0 0.0
  %261 = vmatpush.msra.mxu0 0.0
  %262 = vmatpush.msra.mxu0 0.0
  %263 = vmatpush.msra.mxu0 0.0
  %264 = vmatpush.msra.mxu0 0.0
  %265 = vmatpush.msra.mxu0 0.0
  %266 = vmatpush.msra.mxu0 0.0
  %267 = vmatpush.msra.mxu0 %v225
  %268 = vmatpush.msra.mxu0 %v223
  %269 = vmatpush.msra.mxu0 %v221
  %270 = vmatpush.msra.mxu0 %v219
  %271 = vmatmul.f32.gmra.mxu0 %v233
  %v272 = vpop.f32.mrf.mxu0
  %v273 = vadd.f32 %v229, %v272
  %274 = vdwg.mxu0
  %v275 = vmax.f32 %v253, %v273
  %276 = vmax.xlane.f32.xlu0 %v275
  %v277 = vpop.xlane.xlu0 %276
  %v278 = vsub.f32 %v253, %v277
  %v279 = vsub.f32 %v273, %v277
  %v280 = vmul.f32 %v278, 1.442695
  %v281 = vpow.pop %v280
  %v282 = vmul.f32 %v279, 1.442695
  %v283 = vpow.pop %v282
  %v284 = vadd.f32 %v281, %v283
  %285 = vadd.xlane.f32.xlu0 %v284
  %v286 = vpop.xlane.xlu0 %285
  %v287 = vrcp.pop %v286
  %v288 = vmul.f32 %v286, %v287
  %v289 = vsub.f32 1.0, %v288
  %v290 = vmul.f32 %v287, %v289
  %v291 = vadd.f32 %v287, %v290
  %vm292 = vweird.f32 %v286
  %vm293 = vweird.f32 %v287
  %vm294 = vmor %vm292, %vm293
  %v295 = vsel %vm294, %v287, %v291
  %v296 = vand.u32 2147483647, %v286
  %vm297 = vcmp.eq.f32.partialorder %v296, 8.507059e+37
  %v298 = vand.u32 %v286, 2147483648
  %v299 = vor.u32 1.1754944e-38, %v298
  %v300 = vsel %vm297, %v299, %v295
  %v301 = vmul.f32 1.0, %v300
  %v302 = vmul.f32 %v281, %v301
  %v303 = vmul.f32 %v283, %v301
  %v304 = vpack.c.bf16 %v303, %v302
  %305 = vst [vmem:[%s6] sm:$0xff] %v304
  %v307 = vperm.slane %v35, 0
  %v308 = vperm.slane %v35, 1
  %v311 = vmul.f32 %v281, %v307
  %v312 = vmul.f32 %v283, %v308
  %v313 = vadd.f32 %v311, %v312
  %314 = vadd.xlane.f32.xlu0 %v313
  %v315 = vpop.xlane.xlu0 %314
  %v316 = vmul.f32 %v301, %v315
  %v318 = vperm.slane %v37, 0
  %v319 = vperm.slane %v37, 1
  %v322 = vmul.f32 %v281, %v318
  %v323 = vmul.f32 %v283, %v319
  %v324 = vadd.f32 %v322, %v323
  %325 = vadd.xlane.f32.xlu0 %v324
  %v326 = vpop.xlane.xlu0 %325
  %v327 = vmul.f32 %v301, %v326
  %v328 = vmul.f32 %v316, %v316
  %v329 = vmul.f32 %v327, %v327
  %v330 = vadd.f32 %v328, %v329
  %v332 = vperm.slane %v39, 0
  %v333 = vperm.slane %v39, 1
  %v336 = vmul.f32 %v281, %v332
  %v337 = vmul.f32 %v283, %v333
  %v338 = vadd.f32 %v336, %v337
  %339 = vadd.xlane.f32.xlu0 %v338
  %v340 = vpop.xlane.xlu0 %339
  %v341 = vmul.f32 %v301, %v340
  %v342 = vsub.f32 %v341, %v330
  %v343 = vrot.slane %v342, 4
  %v344 = vadd.f32 %v342, %v343
  %v345 = vrot.slane %v344, 2
  %v346 = vadd.f32 %v344, %v345
  %v347 = vrot.slane %v346, 1
  %v348 = vadd.f32 %v346, %v347
  %v349 = vrot.slane %v330, 4
  %v350 = vadd.f32 %v330, %v349
  %v351 = vrot.slane %v350, 2
  %v352 = vadd.f32 %v350, %v351
  %v353 = vrot.slane %v352, 1
  %v354 = vadd.f32 %v352, %v353
  %v355 = vlaneseq
  %v356 = vand.u32 %v355, 127
  %vm357 = vcmp.eq.s32.totalorder %v356, 0
  %v358 = vsel %vm357, %v316, %v327
  %vm359 = vcmask 15360
  %360 = vst.msk [vmem:[%s7] sm:$0xff] %vm359, %v358
  %v361 = vsel %vm357, %v348, %v354
  %vm362 = vcmask 8192
  %363 = vst.msk [vmem:[%s7 + $0x8] sm:$0x1] %vm362, %v361
  %s364 = scalar_lea.vmem %s0, 8
  %v365 = vld [vmem:[%s364] sm:$0xff]
  %v367 = vperm.slane %v365, 0
  %v368 = vperm.slane %v365, 4
  %v371 = vperm.slane %v367, 0
  %v372 = vperm.slane %v368, 0
  %v373 = vmul.f32 %v44, %v371
  %v374 = vmul.f32 %v44, %v372
  %v375 = vmul.f32 %v49, %v371
  %v376 = vmul.f32 %v49, %v372
  %v377 = vmul.f32 %v54, %v371
  %v378 = vmul.f32 %v54, %v372
  %v379 = vmul.f32 %v59, %v371
  %v380 = vmul.f32 %v59, %v372
  %v381 = vadd.f32 %v373, %v79
  %v382 = vadd.f32 %v374, %v79
  %v383 = vadd.f32 %v375, %v84
  %v384 = vadd.f32 %v376, %v84
  %v385 = vadd.f32 %v377, %v89
  %v386 = vadd.f32 %v378, %v89
  %v387 = vadd.f32 %v379, %v94
  %v388 = vadd.f32 %v380, %v94
  %v389 = vperm.slane %v365, 1
  %v390 = vperm.slane %v365, 5
  %v393 = vperm.slane %v389, 1
  %v394 = vperm.slane %v390, 1
  %v395 = vmul.f32 %v106, %v393
  %v396 = vmul.f32 %v106, %v394
  %v397 = vmul.f32 %v110, %v393
  %v398 = vmul.f32 %v110, %v394
  %v399 = vmul.f32 %v114, %v393
  %v400 = vmul.f32 %v114, %v394
  %v401 = vmul.f32 %v118, %v393
  %v402 = vmul.f32 %v118, %v394
  %v403 = vadd.f32 %v381, %v395
  %v404 = vadd.f32 %v382, %v396
  %v405 = vadd.f32 %v383, %v397
  %v406 = vadd.f32 %v384, %v398
  %v407 = vadd.f32 %v385, %v399
  %v408 = vadd.f32 %v386, %v400
  %v409 = vadd.f32 %v387, %v401
  %v410 = vadd.f32 %v388, %v402
  %v411 = vperm.slane %v365, 2
  %v412 = vperm.slane %v365, 6
  %v415 = vperm.slane %v411, 2
  %v416 = vperm.slane %v412, 2
  %v417 = vmul.f32 %v144, %v415
  %v418 = vmul.f32 %v144, %v416
  %v419 = vmul.f32 %v148, %v415
  %v420 = vmul.f32 %v148, %v416
  %v421 = vmul.f32 %v152, %v415
  %v422 = vmul.f32 %v152, %v416
  %v423 = vmul.f32 %v156, %v415
  %v424 = vmul.f32 %v156, %v416
  %v425 = vadd.f32 %v403, %v417
  %v426 = vadd.f32 %v404, %v418
  %v427 = vadd.f32 %v405, %v419
  %v428 = vadd.f32 %v406, %v420
  %v429 = vadd.f32 %v407, %v421
  %v430 = vadd.f32 %v408, %v422
  %v431 = vadd.f32 %v409, %v423
  %v432 = vadd.f32 %v410, %v424
  %v433 = vperm.slane %v365, 3
  %v434 = vperm.slane %v365, 7
  %v437 = vperm.slane %v433, 3
  %v438 = vperm.slane %v434, 3
  %v439 = vmul.f32 %v182, %v437
  %v440 = vmul.f32 %v182, %v438
  %v441 = vmul.f32 %v186, %v437
  %v442 = vmul.f32 %v186, %v438
  %v443 = vmul.f32 %v190, %v437
  %v444 = vmul.f32 %v190, %v438
  %v445 = vmul.f32 %v194, %v437
  %v446 = vmul.f32 %v194, %v438
  %v447 = vadd.f32 %v425, %v439
  %v448 = vadd.f32 %v426, %v440
  %v449 = vadd.f32 %v427, %v441
  %v450 = vadd.f32 %v428, %v442
  %v451 = vadd.f32 %v429, %v443
  %v452 = vadd.f32 %v430, %v444
  %v453 = vadd.f32 %v431, %v445
  %v454 = vadd.f32 %v432, %v446
  %v455 = vmax.f32 %v447, 0.0
  %v456 = vmax.f32 %v448, 0.0
  %v457 = vmax.f32 %v449, 0.0
  %v458 = vmax.f32 %v450, 0.0
  %v459 = vmax.f32 %v451, 0.0
  %v460 = vmax.f32 %v452, 0.0
  %v461 = vmax.f32 %v453, 0.0
  %v462 = vmax.f32 %v454, 0.0
  %463 = vmatpush.msra.mxu0 0.0
  %464 = vmatpush.msra.mxu0 0.0
  %465 = vmatpush.msra.mxu0 0.0
  %466 = vmatpush.msra.mxu0 0.0
  %467 = vmatpush.msra.mxu0 0.0
  %468 = vmatpush.msra.mxu0 0.0
  %469 = vmatpush.msra.mxu0 0.0
  %470 = vmatpush.msra.mxu0 0.0
  %471 = vmatpush.msra.mxu0 0.0
  %472 = vmatpush.msra.mxu0 0.0
  %473 = vmatpush.msra.mxu0 0.0
  %474 = vmatpush.msra.mxu0 0.0
  %475 = vmatpush.msra.mxu0 %v461
  %476 = vmatpush.msra.mxu0 %v459
  %477 = vmatpush.msra.mxu0 %v457
  %478 = vmatpush.msra.mxu0 %v455
  %479 = vmatmul.f32.gmra.mxu0 %v233
  %v480 = vpop.f32.mrf.mxu0
  %v481 = vadd.f32 %v229, %v480
  %482 = vdwg.mxu0
  %483 = vmatpush.msra.mxu0 0.0
  %484 = vmatpush.msra.mxu0 0.0
  %485 = vmatpush.msra.mxu0 0.0
  %486 = vmatpush.msra.mxu0 0.0
  %487 = vmatpush.msra.mxu0 0.0
  %488 = vmatpush.msra.mxu0 0.0
  %489 = vmatpush.msra.mxu0 0.0
  %490 = vmatpush.msra.mxu0 0.0
  %491 = vmatpush.msra.mxu0 0.0
  %492 = vmatpush.msra.mxu0 0.0
  %493 = vmatpush.msra.mxu0 0.0
  %494 = vmatpush.msra.mxu0 0.0
  %495 = vmatpush.msra.mxu0 %v462
  %496 = vmatpush.msra.mxu0 %v460
  %497 = vmatpush.msra.mxu0 %v458
  %498 = vmatpush.msra.mxu0 %v456
  %499 = vmatmul.f32.gmra.mxu0 %v233
  %v500 = vpop.f32.mrf.mxu0
  %v501 = vadd.f32 %v229, %v500
  %502 = vdwg.mxu0
  %v503 = vmax.f32 %v481, %v501
  %504 = vmax.xlane.f32.xlu0 %v503
  %v505 = vpop.xlane.xlu0 %504
  %v506 = vsub.f32 %v481, %v505
  %v507 = vsub.f32 %v501, %v505
  %v508 = vmul.f32 %v506, 1.442695
  %v509 = vpow.pop %v508
  %v510 = vmul.f32 %v507, 1.442695
  %v511 = vpow.pop %v510
  %v512 = vadd.f32 %v509, %v511
  %513 = vadd.xlane.f32.xlu0 %v512
  %v514 = vpop.xlane.xlu0 %513
  %v515 = vrcp.pop %v514
  %v516 = vmul.f32 %v514, %v515
  %v517 = vsub.f32 1.0, %v516
  %v518 = vmul.f32 %v515, %v517
  %v519 = vadd.f32 %v515, %v518
  %vm520 = vweird.f32 %v514
  %vm521 = vweird.f32 %v515
  %vm522 = vmor %vm520, %vm521
  %v523 = vsel %vm522, %v515, %v519
  %v524 = vand.u32 2147483647, %v514
  %vm525 = vcmp.eq.f32.partialorder %v524, 8.507059e+37
  %v526 = vand.u32 %v514, 2147483648
  %v527 = vor.u32 1.1754944e-38, %v526
  %v528 = vsel %vm525, %v527, %v523
  %v529 = vmul.f32 1.0, %v528
  %v530 = vmul.f32 %v509, %v529
  %v531 = vmul.f32 %v511, %v529
  %v532 = vpack.c.bf16 %v531, %v530
  %s533 = scalar_lea.vmem %s6, 8
  %534 = vst [vmem:[%s533] sm:$0xff] %v532
  %v535 = vmul.f32 %v509, %v307
  %v536 = vmul.f32 %v511, %v308
  %v537 = vadd.f32 %v535, %v536
  %538 = vadd.xlane.f32.xlu0 %v537
  %v539 = vpop.xlane.xlu0 %538
  %v540 = vmul.f32 %v529, %v539
  %v541 = vmul.f32 %v509, %v318
  %v542 = vmul.f32 %v511, %v319
  %v543 = vadd.f32 %v541, %v542
  %544 = vadd.xlane.f32.xlu0 %v543
  %v545 = vpop.xlane.xlu0 %544
  %v546 = vmul.f32 %v529, %v545
  %v547 = vmul.f32 %v540, %v540
  %v548 = vmul.f32 %v546, %v546
  %v549 = vadd.f32 %v547, %v548
  %v550 = vmul.f32 %v509, %v332
  %v551 = vmul.f32 %v511, %v333
  %v552 = vadd.f32 %v550, %v551
  %553 = vadd.xlane.f32.xlu0 %v552
  %v554 = vpop.xlane.xlu0 %553
  %v555 = vmul.f32 %v529, %v554
  %v556 = vsub.f32 %v555, %v549
  %v557 = vrot.slane %v556, 4
  %v558 = vadd.f32 %v556, %v557
  %v559 = vrot.slane %v558, 2
  %v560 = vadd.f32 %v558, %v559
  %v561 = vrot.slane %v560, 1
  %v562 = vadd.f32 %v560, %v561
  %v563 = vrot.slane %v549, 4
  %v564 = vadd.f32 %v549, %v563
  %v565 = vrot.slane %v564, 2
  %v566 = vadd.f32 %v564, %v565
  %v567 = vrot.slane %v566, 1
  %v568 = vadd.f32 %v566, %v567
  %v569 = vsel %vm357, %v540, %v546
  %s570 = scalar_lea.vmem %s7, 16
  %571 = vst.msk [vmem:[%s570] sm:$0xff] %vm359, %v569
  %v572 = vsel %vm357, %v562, %v568
  %573 = vst.msk [vmem:[%s570 + $0x8] sm:$0x1] %vm362, %v572
  // Predicated region
  $region26: #{_run_with_loss.1} parent=0 // pred_check
    _
  $region27: #{_run_with_loss.1} parent=0 // pred_check_branch
    %575 = sbr.rel (0) target = $region29
  $region28: #{_run_with_loss.1} parent=0 // pred_region
    _
  $region29: #{_run_with_loss.1} parent=0 // pred_fallthru
    _
  // Predicated region
  $region30: #{_run_with_loss.1} parent=0 // pred_check
    _
  $region31: #{_run_with_loss.1} parent=0 // pred_check_branch
    %577 = sbr.rel (0) target = $region33
  $region32: #{_run_with_loss.1} parent=0 // pred_region
    _
  $region33: #{_run_with_loss.1} parent=0 // pred_fallthru
    _
  // Predicated region
  $region34: #{_run_with_loss.1} parent=0 // pred_check
    _
  $region35: #{_run_with_loss.1} parent=0 // pred_check_branch
    %579 = sbr.rel (0) target = $region37
  $region36: #{_run_with_loss.1} parent=0 // pred_region
    _
  $region37: #{_run_with_loss.1} parent=0 // pred_fallthru
    _
  // Predicated region
  $region38: #{_run_with_loss.1} parent=0 // pred_check
    _
  $region39: #{_run_with_loss.1} parent=0 // pred_check_branch
    %581 = sbr.rel (0) target = $region41
  $region40: #{_run_with_loss.1} parent=0 // pred_region
    _
  $region41: #{_run_with_loss.1} parent=0 // pred_fallthru
    _

</llo_original>
